<compile_context>
chip_gen: v6e
topology: v6e:2x2x1
jax: 0.10.0
libtpu: 0.0.40
codegen_flags: <defaults>
</compile_context>

<pallas_src>
import jax
import jax.numpy as jnp
from jax import lax
from jax.experimental import pallas as pl
from jax.experimental.pallas import tpu as pltpu


def _round_up(x, m):
    return (x + m - 1) // m * m


def rnn_kernel(emb_ref, h0_ref, wih_ref, whh_ref, b_ref, wfc_ref, bfc_ref,
               logits_ref, hout_ref, xh_ref):
    """Tanh-RNN with hoisted input/output projections.

    emb_ref    : (T, Bp, Ep)   time-major embedded inputs (zero padded)
    h0_ref     : (Bp, Hp)      initial hidden state
    wih_ref    : (Ep, Hp)      W_ih^T (zero padded)
    whh_ref    : (Hp, Hp)      W_hh^T (zero padded)
    b_ref      : (1, Hp)       b_ih + b_hh (zero padded)
    wfc_ref    : (Hp, Vp)      W_fc^T (zero padded)
    bfc_ref    : (1, Vp)       b_fc (zero padded)
    logits_ref : (T, Bp, Vp)   output logits (time-major)
    hout_ref   : (Bp, Hp)      final hidden state
    xh_ref     : (T, Bp, Hp)   VMEM scratch: input projection, then hidden seq
    """
    T, Bp, Ep = emb_ref.shape
    Hp = whh_ref.shape[0]

    # ---- Hoisted input projection: one big MXU matmul + bias (outside loop) ----
    emb = emb_ref[...].reshape(T * Bp, Ep)
    xproj = jnp.dot(emb, wih_ref[...], preferred_element_type=jnp.float32)
    xproj = xproj + b_ref[...]                         # bias broadcast done once
    xh_ref[...] = xproj.reshape(T, Bp, Hp)

    # ---- Serial recurrence: only h @ W_hh + precomputed[t] -> tanh per step ----
    whh = whh_ref[...]                                 # hoisted weight load

    def body(t, h_prev):
        pre = xh_ref[t] + jnp.dot(h_prev, whh, preferred_element_type=jnp.float32)
        h_new = jnp.tanh(pre)
        xh_ref[t] = h_new                              # overwrite slot with h_t
        return h_new

    h_final = lax.fori_loop(0, T, body, h0_ref[...], unroll=True)
    hout_ref[...] = h_final

    # ---- Hoisted output projection: single lane-dense matmul + store ----------
    hseq = xh_ref[...].reshape(T * Bp, Hp)
    logits = jnp.dot(hseq, wfc_ref[...], preferred_element_type=jnp.float32)
    logits = logits + bfc_ref[...]
    logits_ref[...] = logits.reshape(T, Bp, logits_ref.shape[-1])


def simple_rnn_forward(x, h, params):
    """Batch-first forward pass matching SimpleRNN.forward.

    Args:
      x: (B, T) int32 token ids.
      h: (1, B, H) float32 initial hidden state.
      params: dict of weights (PyTorch shape conventions).

    Returns:
      (logits (B, T, V), h_new (1, B, H))
    """
    B, T = x.shape
    H = params["w_hh"].shape[0]
    V, E = params["embed"].shape

    # Hardware-tile padding: sublanes (8) on batch, lanes (128) on feature dims.
    Bp = _round_up(B, 8)
    Ep = _round_up(E, 128)
    Hp = _round_up(H, 128)
    Vp = _round_up(V, 128)

    # Embedding lookup (glue, plain JAX), then time-major + zero-pad.
    # TODO(synk): for large vocab/T, stream the gather via scalar-prefetch
    # (PrefetchScalarGridSpec + pl.Element row gather) and time-block the grid
    # with a persistent hidden scratch instead of keeping (T,B,*) resident.
    embedded = jnp.take(params["embed"], x, axis=0)               # (B, T, E)
    emb_tbe = jnp.transpose(embedded, (1, 0, 2))                  # (T, B, E)
    emb_pad = jnp.zeros((T, Bp, Ep), jnp.float32).at[:, :B, :E].set(emb_tbe)

    # Pre-transpose + zero-pad weights so padded hidden lanes stay inert.
    wih_t = jnp.zeros((Ep, Hp), jnp.float32).at[:E, :H].set(params["w_ih"].T)
    whh_t = jnp.zeros((Hp, Hp), jnp.float32).at[:H, :H].set(params["w_hh"].T)
    b = jnp.zeros((1, Hp), jnp.float32).at[0, :H].set(params["b_ih"] + params["b_hh"])
    wfc_t = jnp.zeros((Hp, Vp), jnp.float32).at[:H, :V].set(params["w_fc"].T)
    bfc = jnp.zeros((1, Vp), jnp.float32).at[0, :V].set(params["b_fc"])

    h0 = jnp.zeros((Bp, Hp), jnp.float32).at[:B, :H].set(h[0])    # (Bp, Hp)

    vmem = pl.BlockSpec(memory_space=pltpu.MemorySpace.VMEM)
    logits_tbv, h_final = pl.pallas_call(
        rnn_kernel,
        out_shape=(
            jax.ShapeDtypeStruct((T, Bp, Vp), jnp.float32),
            jax.ShapeDtypeStruct((Bp, Hp), jnp.float32),
        ),
        in_specs=[vmem] * 7,
        out_specs=(vmem, vmem),
        scratch_shapes=[pltpu.VMEM((T, Bp, Hp), jnp.float32)],
    )(emb_pad, h0, wih_t, whh_t, b, wfc_t, bfc)

    # Slice padding off and return PyTorch-convention shapes.
    logits = jnp.transpose(logits_tbv[:, :B, :V], (1, 0, 2))      # (B, T, V)
    h_new = h_final[:B, :H][None, :, :]                           # (1, B, H)
    return logits, h_new


def _reference_forward(x, h, params):
    """Pure-JAX reference (mirrors torch.nn.RNN + Linear) for validation."""
    embedded = jnp.take(params["embed"], x, axis=0)               # (B, T, E)
    wih_t = params["w_ih"].T
    whh_t = params["w_hh"].T
    b = params["b_ih"] + params["b_hh"]

    def step(h_prev, x_t):
        h_new = jnp.tanh(x_t @ wih_t + h_prev @ whh_t + b)
        return h_new, h_new

    h_fin, hs = lax.scan(step, h[0], jnp.transpose(embedded, (1, 0, 2)))
    out = jnp.transpose(hs, (1, 0, 2))                            # (B, T, H)
    logits = out @ params["w_fc"].T + params["b_fc"]
    return logits, h_fin[None, :, :]


def init_params(key, vocab_size, embedding_dim, hidden_size):
    """Deterministic parameter init with PyTorch-style shapes."""
    ks = jax.random.split(key, 7)
    s = 0.1
    return {
        "embed": s * jax.random.normal(ks[0], (vocab_size, embedding_dim), jnp.float32),
        "w_ih":  s * jax.random.normal(ks[1], (hidden_size, embedding_dim), jnp.float32),
        "w_hh":  s * jax.random.normal(ks[2], (hidden_size, hidden_size), jnp.float32),
        "b_ih":  s * jax.random.normal(ks[3], (hidden_size,), jnp.float32),
        "b_hh":  s * jax.random.normal(ks[4], (hidden_size,), jnp.float32),
        "w_fc":  s * jax.random.normal(ks[5], (vocab_size, hidden_size), jnp.float32),
        "b_fc":  s * jax.random.normal(ks[6], (vocab_size,), jnp.float32),
    }


if __name__ == "__main__":
    VOCAB_SIZE = 26      # len('abcdefghijklmnopqrstuvwxyz')
    EMBED_DIM = 16
    HIDDEN = 32
    BATCH = 2
    SEQ = 8

    key = jax.random.PRNGKey(0)
    pkey, xkey = jax.random.split(key)
    params = init_params(pkey, VOCAB_SIZE, EMBED_DIM, HIDDEN)

    x = jax.random.randint(xkey, (BATCH, SEQ), 0, VOCAB_SIZE, dtype=jnp.int32)
    h0 = jnp.zeros((1, BATCH, HIDDEN), jnp.float32)               # init_hidden

    logits, h_new = jax.jit(simple_rnn_forward)(x, h0, params)
    jax.block_until_ready((logits, h_new))

    assert logits.shape == (BATCH, SEQ, VOCAB_SIZE)
    assert h_new.shape == (1, BATCH, HIDDEN)

    # Validate against a pure-JAX reference of the same forward pass.
    ref_logits, ref_h = _reference_forward(x, h0, params)
    assert jnp.allclose(logits, ref_logits, atol=1e-5, rtol=1e-5)
    assert jnp.allclose(h_new, ref_h, atol=1e-5, rtol=1e-5)

    print("KERNEL_OK")
</pallas_src>

<mosaic_0001>
module attributes {stable_mosaic.version = 11 : i64} {
  func.func @rnn_kernel(%arg0: memref<8x8x128xf32, #tpu.memory_space<vmem>>, %arg1: memref<8x128xf32, #tpu.memory_space<vmem>>, %arg2: memref<128x128xf32, #tpu.memory_space<vmem>>, %arg3: memref<128x128xf32, #tpu.memory_space<vmem>>, %arg4: memref<1x128xf32, #tpu.memory_space<vmem>>, %arg5: memref<128x128xf32, #tpu.memory_space<vmem>>, %arg6: memref<1x128xf32, #tpu.memory_space<vmem>>, %arg7: memref<8x8x128xf32, #tpu.memory_space<vmem>>, %arg8: memref<8x128xf32, #tpu.memory_space<vmem>>, %arg9: memref<8x8x128xf32, #tpu.memory_space<vmem>>) attributes {dimension_semantics = [], scalar_prefetch = 0 : i64, scratch_operands = 1 : i64, tpu.core_type = #tpu.core_type<tc>} {
    %c0 = arith.constant 0 : index
    %c0_0 = arith.constant 0 : index
    %c0_1 = arith.constant 0 : index
    %0 = vector.load %arg0[%c0, %c0_0, %c0_1] : memref<8x8x128xf32, #tpu.memory_space<vmem>>, vector<8x8x128xf32>
    %1 = vector.shape_cast %0 : vector<8x8x128xf32> to vector<64x128xf32>
    %c0_2 = arith.constant 0 : index
    %c0_3 = arith.constant 0 : index
    %2 = vector.load %arg2[%c0_2, %c0_3] : memref<128x128xf32, #tpu.memory_space<vmem>>, vector<128x128xf32>
    %cst = arith.constant dense<0.000000e+00> : vector<64x128xf32>
    %3 = tpu.matmul %1, %2, %cst {dimension_numbers = #tpu.dot_dimension_numbers<[1], [0], [0], [1], [0, 0, 1, 1], [], []>} : vector<64x128xf32>, vector<128x128xf32>, vector<64x128xf32> -> vector<64x128xf32>
    %c0_4 = arith.constant 0 : index
    %c0_5 = arith.constant 0 : index
    %4 = vector.load %arg4[%c0_4, %c0_5] : memref<1x128xf32, #tpu.memory_space<vmem>>, vector<1x128xf32>
    %5 = vector.broadcast %4 : vector<1x128xf32> to vector<64x128xf32>
    %6 = arith.addf %3, %5 : vector<64x128xf32>
    %7 = vector.shape_cast %6 : vector<64x128xf32> to vector<8x8x128xf32>
    %c0_6 = arith.constant 0 : index
    %c0_7 = arith.constant 0 : index
    %c0_8 = arith.constant 0 : index
    %8 = vector.load %arg9[%c0_6, %c0_7, %c0_8] : memref<8x8x128xf32, #tpu.memory_space<vmem>>, vector<8x8x128xf32>
    tpu.vector_store %arg9[%c0_6, %c0_7, %c0_8], %7 {strides = array<i32>} : memref<8x8x128xf32, #tpu.memory_space<vmem>>, vector<8x8x128xf32>,
    %c0_9 = arith.constant 0 : index
    %c0_10 = arith.constant 0 : index
    %9 = vector.load %arg3[%c0_9, %c0_10] : memref<128x128xf32, #tpu.memory_space<vmem>>, vector<128x128xf32>
    %c0_11 = arith.constant 0 : index
    %c0_12 = arith.constant 0 : index
    %10 = vector.load %arg1[%c0_11, %c0_12] : memref<8x128xf32, #tpu.memory_space<vmem>>, vector<8x128xf32>
    %c0_i32 = arith.constant 0 : i32
    %11 = arith.index_cast %c0_i32 : i32 to index
    %c0_13 = arith.constant 0 : index
    %c0_14 = arith.constant 0 : index
    %12 = vector.load %arg9[%11, %c0_13, %c0_14] : memref<8x8x128xf32, #tpu.memory_space<vmem>>, vector<1x8x128xf32>
    %13 = vector.shape_cast %12 : vector<1x8x128xf32> to vector<8x128xf32>
    %cst_15 = arith.constant dense<0.000000e+00> : vector<8x128xf32>
    %14 = tpu.matmul %10, %9, %cst_15 {dimension_numbers = #tpu.dot_dimension_numbers<[1], [0], [0], [1], [0, 0, 1, 1], [], []>} : vector<8x128xf32>, vector<128x128xf32>, vector<8x128xf32> -> vector<8x128xf32>
    %15 = arith.addf %13, %14 : vector<8x128xf32>
    %16 = math.tanh %15 : vector<8x128xf32>
    %17 = arith.index_cast %c0_i32 : i32 to index
    %c0_16 = arith.constant 0 : index
    %c0_17 = arith.constant 0 : index
    %18 = vector.load %arg9[%17, %c0_16, %c0_17] : memref<8x8x128xf32, #tpu.memory_space<vmem>>, vector<1x8x128xf32>
    %19 = vector.shape_cast %18 : vector<1x8x128xf32> to vector<8x128xf32>
    %20 = vector.shape_cast %16 : vector<8x128xf32> to vector<1x8x128xf32>
    tpu.vector_store %arg9[%17, %c0_16, %c0_17], %20 {strides = array<i32>} : memref<8x8x128xf32, #tpu.memory_space<vmem>>, vector<1x8x128xf32>,
    %c1_i32 = arith.constant 1 : i32
    %21 = arith.index_cast %c1_i32 : i32 to index
    %c0_18 = arith.constant 0 : index
    %c0_19 = arith.constant 0 : index
    %22 = vector.load %arg9[%21, %c0_18, %c0_19] : memref<8x8x128xf32, #tpu.memory_space<vmem>>, vector<1x8x128xf32>
    %23 = vector.shape_cast %22 : vector<1x8x128xf32> to vector<8x128xf32>
    %cst_20 = arith.constant dense<0.000000e+00> : vector<8x128xf32>
    %24 = tpu.matmul %16, %9, %cst_20 {dimension_numbers = #tpu.dot_dimension_numbers<[1], [0], [0], [1], [0, 0, 1, 1], [], []>} : vector<8x128xf32>, vector<128x128xf32>, vector<8x128xf32> -> vector<8x128xf32>
    %25 = arith.addf %23, %24 : vector<8x128xf32>
    %26 = math.tanh %25 : vector<8x128xf32>
    %27 = arith.index_cast %c1_i32 : i32 to index
    %c0_21 = arith.constant 0 : index
    %c0_22 = arith.constant 0 : index
    %28 = vector.load %arg9[%27, %c0_21, %c0_22] : memref<8x8x128xf32, #tpu.memory_space<vmem>>, vector<1x8x128xf32>
    %29 = vector.shape_cast %28 : vector<1x8x128xf32> to vector<8x128xf32>
    %30 = vector.shape_cast %26 : vector<8x128xf32> to vector<1x8x128xf32>
    tpu.vector_store %arg9[%27, %c0_21, %c0_22], %30 {strides = array<i32>} : memref<8x8x128xf32, #tpu.memory_space<vmem>>, vector<1x8x128xf32>,
    %c2_i32 = arith.constant 2 : i32
    %31 = arith.index_cast %c2_i32 : i32 to index
    %c0_23 = arith.constant 0 : index
    %c0_24 = arith.constant 0 : index
    %32 = vector.load %arg9[%31, %c0_23, %c0_24] : memref<8x8x128xf32, #tpu.memory_space<vmem>>, vector<1x8x128xf32>
    %33 = vector.shape_cast %32 : vector<1x8x128xf32> to vector<8x128xf32>
    %cst_25 = arith.constant dense<0.000000e+00> : vector<8x128xf32>
    %34 = tpu.matmul %26, %9, %cst_25 {dimension_numbers = #tpu.dot_dimension_numbers<[1], [0], [0], [1], [0, 0, 1, 1], [], []>} : vector<8x128xf32>, vector<128x128xf32>, vector<8x128xf32> -> vector<8x128xf32>
    %35 = arith.addf %33, %34 : vector<8x128xf32>
    %36 = math.tanh %35 : vector<8x128xf32>
    %37 = arith.index_cast %c2_i32 : i32 to index
    %c0_26 = arith.constant 0 : index
    %c0_27 = arith.constant 0 : index
    %38 = vector.load %arg9[%37, %c0_26, %c0_27] : memref<8x8x128xf32, #tpu.memory_space<vmem>>, vector<1x8x128xf32>
    %39 = vector.shape_cast %38 : vector<1x8x128xf32> to vector<8x128xf32>
    %40 = vector.shape_cast %36 : vector<8x128xf32> to vector<1x8x128xf32>
    tpu.vector_store %arg9[%37, %c0_26, %c0_27], %40 {strides = array<i32>} : memref<8x8x128xf32, #tpu.memory_space<vmem>>, vector<1x8x128xf32>,
    %c3_i32 = arith.constant 3 : i32
    %41 = arith.index_cast %c3_i32 : i32 to index
    %c0_28 = arith.constant 0 : index
    %c0_29 = arith.constant 0 : index
    %42 = vector.load %arg9[%41, %c0_28, %c0_29] : memref<8x8x128xf32, #tpu.memory_space<vmem>>, vector<1x8x128xf32>
    %43 = vector.shape_cast %42 : vector<1x8x128xf32> to vector<8x128xf32>
    %cst_30 = arith.constant dense<0.000000e+00> : vector<8x128xf32>
    %44 = tpu.matmul %36, %9, %cst_30 {dimension_numbers = #tpu.dot_dimension_numbers<[1], [0], [0], [1], [0, 0, 1, 1], [], []>} : vector<8x128xf32>, vector<128x128xf32>, vector<8x128xf32> -> vector<8x128xf32>
    %45 = arith.addf %43, %44 : vector<8x128xf32>
    %46 = math.tanh %45 : vector<8x128xf32>
    %47 = arith.index_cast %c3_i32 : i32 to index
    %c0_31 = arith.constant 0 : index
    %c0_32 = arith.constant 0 : index
    %48 = vector.load %arg9[%47, %c0_31, %c0_32] : memref<8x8x128xf32, #tpu.memory_space<vmem>>, vector<1x8x128xf32>
    %49 = vector.shape_cast %48 : vector<1x8x128xf32> to vector<8x128xf32>
    %50 = vector.shape_cast %46 : vector<8x128xf32> to vector<1x8x128xf32>
    tpu.vector_store %arg9[%47, %c0_31, %c0_32], %50 {strides = array<i32>} : memref<8x8x128xf32, #tpu.memory_space<vmem>>, vector<1x8x128xf32>,
    %c4_i32 = arith.constant 4 : i32
    %51 = arith.index_cast %c4_i32 : i32 to index
    %c0_33 = arith.constant 0 : index
    %c0_34 = arith.constant 0 : index
    %52 = vector.load %arg9[%51, %c0_33, %c0_34] : memref<8x8x128xf32, #tpu.memory_space<vmem>>, vector<1x8x128xf32>
    %53 = vector.shape_cast %52 : vector<1x8x128xf32> to vector<8x128xf32>
    %cst_35 = arith.constant dense<0.000000e+00> : vector<8x128xf32>
    %54 = tpu.matmul %46, %9, %cst_35 {dimension_numbers = #tpu.dot_dimension_numbers<[1], [0], [0], [1], [0, 0, 1, 1], [], []>} : vector<8x128xf32>, vector<128x128xf32>, vector<8x128xf32> -> vector<8x128xf32>
    %55 = arith.addf %53, %54 : vector<8x128xf32>
    %56 = math.tanh %55 : vector<8x128xf32>
    %57 = arith.index_cast %c4_i32 : i32 to index
    %c0_36 = arith.constant 0 : index
    %c0_37 = arith.constant 0 : index
    %58 = vector.load %arg9[%57, %c0_36, %c0_37] : memref<8x8x128xf32, #tpu.memory_space<vmem>>, vector<1x8x128xf32>
    %59 = vector.shape_cast %58 : vector<1x8x128xf32> to vector<8x128xf32>
    %60 = vector.shape_cast %56 : vector<8x128xf32> to vector<1x8x128xf32>
    tpu.vector_store %arg9[%57, %c0_36, %c0_37], %60 {strides = array<i32>} : memref<8x8x128xf32, #tpu.memory_space<vmem>>, vector<1x8x128xf32>,
    %c5_i32 = arith.constant 5 : i32
    %61 = arith.index_cast %c5_i32 : i32 to index
    %c0_38 = arith.constant 0 : index
    %c0_39 = arith.constant 0 : index
    %62 = vector.load %arg9[%61, %c0_38, %c0_39] : memref<8x8x128xf32, #tpu.memory_space<vmem>>, vector<1x8x128xf32>
    %63 = vector.shape_cast %62 : vector<1x8x128xf32> to vector<8x128xf32>
    %cst_40 = arith.constant dense<0.000000e+00> : vector<8x128xf32>
    %64 = tpu.matmul %56, %9, %cst_40 {dimension_numbers = #tpu.dot_dimension_numbers<[1], [0], [0], [1], [0, 0, 1, 1], [], []>} : vector<8x128xf32>, vector<128x128xf32>, vector<8x128xf32> -> vector<8x128xf32>
    %65 = arith.addf %63, %64 : vector<8x128xf32>
    %66 = math.tanh %65 : vector<8x128xf32>
    %67 = arith.index_cast %c5_i32 : i32 to index
    %c0_41 = arith.constant 0 : index
    %c0_42 = arith.constant 0 : index
    %68 = vector.load %arg9[%67, %c0_41, %c0_42] : memref<8x8x128xf32, #tpu.memory_space<vmem>>, vector<1x8x128xf32>
    %69 = vector.shape_cast %68 : vector<1x8x128xf32> to vector<8x128xf32>
    %70 = vector.shape_cast %66 : vector<8x128xf32> to vector<1x8x128xf32>
    tpu.vector_store %arg9[%67, %c0_41, %c0_42], %70 {strides = array<i32>} : memref<8x8x128xf32, #tpu.memory_space<vmem>>, vector<1x8x128xf32>,
    %c6_i32 = arith.constant 6 : i32
    %71 = arith.index_cast %c6_i32 : i32 to index
    %c0_43 = arith.constant 0 : index
    %c0_44 = arith.constant 0 : index
    %72 = vector.load %arg9[%71, %c0_43, %c0_44] : memref<8x8x128xf32, #tpu.memory_space<vmem>>, vector<1x8x128xf32>
    %73 = vector.shape_cast %72 : vector<1x8x128xf32> to vector<8x128xf32>
    %cst_45 = arith.constant dense<0.000000e+00> : vector<8x128xf32>
    %74 = tpu.matmul %66, %9, %cst_45 {dimension_numbers = #tpu.dot_dimension_numbers<[1], [0], [0], [1], [0, 0, 1, 1], [], []>} : vector<8x128xf32>, vector<128x128xf32>, vector<8x128xf32> -> vector<8x128xf32>
    %75 = arith.addf %73, %74 : vector<8x128xf32>
    %76 = math.tanh %75 : vector<8x128xf32>
    %77 = arith.index_cast %c6_i32 : i32 to index
    %c0_46 = arith.constant 0 : index
    %c0_47 = arith.constant 0 : index
    %78 = vector.load %arg9[%77, %c0_46, %c0_47] : memref<8x8x128xf32, #tpu.memory_space<vmem>>, vector<1x8x128xf32>
    %79 = vector.shape_cast %78 : vector<1x8x128xf32> to vector<8x128xf32>
    %80 = vector.shape_cast %76 : vector<8x128xf32> to vector<1x8x128xf32>
    tpu.vector_store %arg9[%77, %c0_46, %c0_47], %80 {strides = array<i32>} : memref<8x8x128xf32, #tpu.memory_space<vmem>>, vector<1x8x128xf32>,
    %c7_i32 = arith.constant 7 : i32
    %81 = arith.index_cast %c7_i32 : i32 to index
    %c0_48 = arith.constant 0 : index
    %c0_49 = arith.constant 0 : index
    %82 = vector.load %arg9[%81, %c0_48, %c0_49] : memref<8x8x128xf32, #tpu.memory_space<vmem>>, vector<1x8x128xf32>
    %83 = vector.shape_cast %82 : vector<1x8x128xf32> to vector<8x128xf32>
    %cst_50 = arith.constant dense<0.000000e+00> : vector<8x128xf32>
    %84 = tpu.matmul %76, %9, %cst_50 {dimension_numbers = #tpu.dot_dimension_numbers<[1], [0], [0], [1], [0, 0, 1, 1], [], []>} : vector<8x128xf32>, vector<128x128xf32>, vector<8x128xf32> -> vector<8x128xf32>
    %85 = arith.addf %83, %84 : vector<8x128xf32>
    %86 = math.tanh %85 : vector<8x128xf32>
    %87 = arith.index_cast %c7_i32 : i32 to index
    %c0_51 = arith.constant 0 : index
    %c0_52 = arith.constant 0 : index
    %88 = vector.load %arg9[%87, %c0_51, %c0_52] : memref<8x8x128xf32, #tpu.memory_space<vmem>>, vector<1x8x128xf32>
    %89 = vector.shape_cast %88 : vector<1x8x128xf32> to vector<8x128xf32>
    %90 = vector.shape_cast %86 : vector<8x128xf32> to vector<1x8x128xf32>
    tpu.vector_store %arg9[%87, %c0_51, %c0_52], %90 {strides = array<i32>} : memref<8x8x128xf32, #tpu.memory_space<vmem>>, vector<1x8x128xf32>,
    %c8_i32 = arith.constant 8 : i32
    %c0_53 = arith.constant 0 : index
    %c0_54 = arith.constant 0 : index
    %91 = vector.load %arg8[%c0_53, %c0_54] : memref<8x128xf32, #tpu.memory_space<vmem>>, vector<8x128xf32>
    tpu.vector_store %arg8[%c0_53, %c0_54], %86 {strides = array<i32>} : memref<8x128xf32, #tpu.memory_space<vmem>>, vector<8x128xf32>,
    %c0_55 = arith.constant 0 : index
    %c0_56 = arith.constant 0 : index
    %c0_57 = arith.constant 0 : index
    %92 = vector.load %arg9[%c0_55, %c0_56, %c0_57] : memref<8x8x128xf32, #tpu.memory_space<vmem>>, vector<8x8x128xf32>
    %93 = vector.shape_cast %92 : vector<8x8x128xf32> to vector<64x128xf32>
    %c0_58 = arith.constant 0 : index
    %c0_59 = arith.constant 0 : index
    %94 = vector.load %arg5[%c0_58, %c0_59] : memref<128x128xf32, #tpu.memory_space<vmem>>, vector<128x128xf32>
    %cst_60 = arith.constant dense<0.000000e+00> : vector<64x128xf32>
    %95 = tpu.matmul %93, %94, %cst_60 {dimension_numbers = #tpu.dot_dimension_numbers<[1], [0], [0], [1], [0, 0, 1, 1], [], []>} : vector<64x128xf32>, vector<128x128xf32>, vector<64x128xf32> -> vector<64x128xf32>
    %c0_61 = arith.constant 0 : index
    %c0_62 = arith.constant 0 : index
    %96 = vector.load %arg6[%c0_61, %c0_62] : memref<1x128xf32, #tpu.memory_space<vmem>>, vector<1x128xf32>
    %97 = vector.broadcast %96 : vector<1x128xf32> to vector<64x128xf32>
    %98 = arith.addf %95, %97 : vector<64x128xf32>
    %99 = vector.shape_cast %98 : vector<64x128xf32> to vector<8x8x128xf32>
    %c0_63 = arith.constant 0 : index
    %c0_64 = arith.constant 0 : index
    %c0_65 = arith.constant 0 : index
    %100 = vector.load %arg7[%c0_63, %c0_64, %c0_65] : memref<8x8x128xf32, #tpu.memory_space<vmem>>, vector<8x8x128xf32>
    tpu.vector_store %arg7[%c0_63, %c0_64, %c0_65], %99 {strides = array<i32>} : memref<8x8x128xf32, #tpu.memory_space<vmem>>, vector<8x8x128xf32>,
    return
  }
}

</mosaic_0001>

<llo_original>
// kernel: simple_rnn_forward.1
$region0: #{simple_rnn_forward.1}
  #allocation0 [shape = 'u32[]', space=smem, size = 0x4, offset = 0x4, fixed_abs, tag = 'smem constant byte address 0x4 - core index']
  #allocation1 [shape = 'u32[144,128]{1,0:T(1,128)}', space=vmem, size = 0x12000, scoped, tag = 'internal scratch']
  #allocation2 [shape = 'f32[8,8,128]{2,1,0:T(8,128)}', space=vmem, size = 0x8000, scoped, tag = 'scratch operand']
  %s0 = inlined_call_operand.vmem [shape: f32[8,8,128], index: 0, kind: input, shape index: {}]
  %s1 = inlined_call_operand.vmem [shape: f32[8,128], index: 1, kind: input, shape index: {}]
  %s2 = inlined_call_operand.vmem [shape: f32[128,128], index: 2, kind: input, shape index: {}]
  %s3 = inlined_call_operand.vmem [shape: f32[128,128], index: 3, kind: input, shape index: {}]
  %s4 = inlined_call_operand.vmem [shape: f32[1,128], index: 4, kind: input, shape index: {}]
  %s5 = inlined_call_operand.vmem [shape: f32[128,128], index: 5, kind: input, shape index: {}]
  %s6 = inlined_call_operand.vmem [shape: f32[1,128], index: 6, kind: input, shape index: {}]
  %s7 = inlined_call_operand.vmem [shape: f32[8,8,128], index: 7, kind: output, shape index: {0}]
  %s8 = inlined_call_operand.vmem [shape: f32[8,128], index: 8, kind: output, shape index: {1}]
  %9 = xla_tuple %s7, %s8
  %s10 = sld [smem:[#allocation0]]
  $region46: #{simple_rnn_forward.1} parent=0
    _
  %s12 = ssub.s32 1, %s10
  %s13 = scalar_select 0, %s12, %s10
  // Predicated region
  $region2: #{simple_rnn_forward.1} parent=0 // pred_check
    _
  $region3: #{simple_rnn_forward.1} parent=0 // pred_check_branch
    %15 = sbr.rel (0) target = $region5
  $region4: #{simple_rnn_forward.1} parent=0 // pred_region
    _
  $region5: #{simple_rnn_forward.1} parent=0 // pred_fallthru
    _
  // Predicated region
  $region6: #{simple_rnn_forward.1} parent=0 // pred_check
    _
  $region7: #{simple_rnn_forward.1} parent=0 // pred_check_branch
    %17 = sbr.rel (0) target = $region9
  $region8: #{simple_rnn_forward.1} parent=0 // pred_region
    _
  $region9: #{simple_rnn_forward.1} parent=0 // pred_fallthru
    _
  // Predicated region
  $region10: #{simple_rnn_forward.1} parent=0 // pred_check
    _
  $region11: #{simple_rnn_forward.1} parent=0 // pred_check_branch
    %19 = sbr.rel (0) target = $region13
  $region12: #{simple_rnn_forward.1} parent=0 // pred_region
    _
  $region13: #{simple_rnn_forward.1} parent=0 // pred_fallthru
    _
  // Predicated region
  $region14: #{simple_rnn_forward.1} parent=0 // pred_check
    _
  $region15: #{simple_rnn_forward.1} parent=0 // pred_check_branch
    %21 = sbr.rel (0) target = $region17
  $region16: #{simple_rnn_forward.1} parent=0 // pred_region
    _
  $region17: #{simple_rnn_forward.1} parent=0 // pred_fallthru
    _
  // Predicated region
  $region18: #{simple_rnn_forward.1} parent=0 // pred_check
    _
  $region19: #{simple_rnn_forward.1} parent=0 // pred_check_branch
    %23 = sbr.rel (0) target = $region21
  $region20: #{simple_rnn_forward.1} parent=0 // pred_region
    _
  $region21: #{simple_rnn_forward.1} parent=0 // pred_fallthru
    _
  // Predicated region
  $region22: #{simple_rnn_forward.1} parent=0 // pred_check
    _
  $region23: #{simple_rnn_forward.1} parent=0 // pred_check_branch
    %25 = sbr.rel (0) target = $region25
  $region24: #{simple_rnn_forward.1} parent=0 // pred_region
    _
  $region25: #{simple_rnn_forward.1} parent=0 // pred_fallthru
    _
  // Predicated region
  $region26: #{simple_rnn_forward.1} parent=0 // pred_check
    _
  $region27: #{simple_rnn_forward.1} parent=0 // pred_check_branch
    %27 = sbr.rel (0) target = $region29
  $region28: #{simple_rnn_forward.1} parent=0 // pred_region
    _
  $region29: #{simple_rnn_forward.1} parent=0 // pred_fallthru
    _
  %v28 = vld [vmem:[%s0] sm:$0xff]
  %v29 = vld [vmem:[%s0 + $0x8] sm:$0xff]
  %v30 = vld [vmem:[%s0 + $0x10] sm:$0xff]
  %v31 = vld [vmem:[%s0 + $0x18] sm:$0xff]
  %v32 = vld [vmem:[%s0 + $0x20] sm:$0xff]
  %v33 = vld [vmem:[%s0 + $0x28] sm:$0xff]
  %v34 = vld [vmem:[%s0 + $0x30] sm:$0xff]
  %v35 = vld [vmem:[%s0 + $0x38] sm:$0xff]
  %v36 = vld [vmem:[%s2] sm:$0xff]
  %v37 = vld [vmem:[%s2 + $0x8] sm:$0xff]
  %v38 = vld [vmem:[%s2 + $0x10] sm:$0xff]
  %v39 = vld [vmem:[%s2 + $0x18] sm:$0xff]
  %v40 = vld [vmem:[%s2 + $0x20] sm:$0xff]
  %v41 = vld [vmem:[%s2 + $0x28] sm:$0xff]
  %v42 = vld [vmem:[%s2 + $0x30] sm:$0xff]
  %v43 = vld [vmem:[%s2 + $0x38] sm:$0xff]
  %v44 = vld [vmem:[%s2 + $0x40] sm:$0xff]
  %v45 = vld [vmem:[%s2 + $0x48] sm:$0xff]
  %v46 = vld [vmem:[%s2 + $0x50] sm:$0xff]
  %v47 = vld [vmem:[%s2 + $0x58] sm:$0xff]
  %v48 = vld [vmem:[%s2 + $0x60] sm:$0xff]
  %v49 = vld [vmem:[%s2 + $0x68] sm:$0xff]
  %v50 = vld [vmem:[%s2 + $0x70] sm:$0xff]
  %v51 = vld [vmem:[%s2 + $0x78] sm:$0xff]
  %v52 = vld [vmem:[%s4] sm:$0x1]
  %v54 = vlaneseq
  %v55 = vshrl.u32 %v54, 7
  %v56 = vsub.s32 0, %v55
  %v57 = vrot.slane %v52, %v56
  %59 = vmatprep.subr.mxu0 0.0
  %60 = vmatpush1.msra.mxu0 %v51
  %61 = vmatprep.subr.mxu0 0.0
  %62 = vmatpush1.msra.mxu0 %v50
  %63 = vmatprep.subr.mxu0 0.0
  %64 = vmatpush1.msra.mxu0 %v49
  %65 = vmatprep.subr.mxu0 0.0
  %66 = vmatpush1.msra.mxu0 %v48
  %67 = vmatprep.subr.mxu0 0.0
  %68 = vmatpush1.msra.mxu0 %v47
  %69 = vmatprep.subr.mxu0 0.0
  %70 = vmatpush1.msra.mxu0 %v46
  %71 = vmatprep.subr.mxu0 0.0
  %72 = vmatpush1.msra.mxu0 %v45
  %73 = vmatprep.subr.mxu0 0.0
  %74 = vmatpush1.msra.mxu0 %v44
  %75 = vmatprep.subr.mxu0 0.0
  %76 = vmatpush1.msra.mxu0 %v43
  %77 = vmatprep.subr.mxu0 0.0
  %78 = vmatpush1.msra.mxu0 %v42
  %79 = vmatprep.subr.mxu0 0.0
  %80 = vmatpush1.msra.mxu0 %v41
  %81 = vmatprep.subr.mxu0 0.0
  %82 = vmatpush1.msra.mxu0 %v40
  %83 = vmatprep.subr.mxu0 0.0
  %84 = vmatpush1.msra.mxu0 %v39
  %85 = vmatprep.subr.mxu0 0.0
  %86 = vmatpush1.msra.mxu0 %v38
  %87 = vmatprep.subr.mxu0 0.0
  %88 = vmatpush1.msra.mxu0 %v37
  %89 = vmatprep.subr.mxu0 0.0
  %90 = vmatpush1.msra.mxu0 %v36
  %91 = vmatprep.subr.mxu0 0.0
  %92 = vmatpush2.msra.mxu0 0.0
  %93 = vmatprep.subr.mxu0 0.0
  %94 = vmatpush2.msra.mxu0 0.0
  %95 = vmatprep.subr.mxu0 0.0
  %96 = vmatpush2.msra.mxu0 0.0
  %97 = vmatprep.subr.mxu0 0.0
  %98 = vmatpush2.msra.mxu0 0.0
  %99 = vmatprep.subr.mxu0 0.0
  %100 = vmatpush2.msra.mxu0 0.0
  %101 = vmatprep.subr.mxu0 0.0
  %102 = vmatpush2.msra.mxu0 0.0
  %103 = vmatprep.subr.mxu0 0.0
  %104 = vmatpush2.msra.mxu0 0.0
  %105 = vmatprep.subr.mxu0 0.0
  %106 = vmatpush2.msra.mxu0 0.0
  %107 = vmatprep.subr.mxu0 0.0
  %108 = vmatpush2.msra.mxu0 0.0
  %109 = vmatprep.subr.mxu0 0.0
  %110 = vmatpush2.msra.mxu0 0.0
  %111 = vmatprep.subr.mxu0 0.0
  %112 = vmatpush2.msra.mxu0 0.0
  %113 = vmatprep.subr.mxu0 0.0
  %114 = vmatpush2.msra.mxu0 0.0
  %115 = vmatprep.subr.mxu0 0.0
  %116 = vmatpush2.msra.mxu0 0.0
  %117 = vmatprep.subr.mxu0 0.0
  %118 = vmatpush2.msra.mxu0 0.0
  %119 = vmatprep.subr.mxu0 0.0
  %120 = vmatpush2.msra.mxu0 0.0
  %121 = vmatprep.subr.mxu0 0.0
  %122 = vmatpush2.msra.mxu0 0.0
  %123 = vmatprep.mubr.f32.mxu0 0.0
  %124 = vmatmul.mubr.f32.gmra.mxu0 %v28
  %v125 = vpop.f32.mrf.mxu0
  %v126 = vadd.f32 %v57, %v125
  %v127 = vpop.f32.mrf.mxu0
  %128 = vmatprep.mubr.f32.mxu0 0.0
  %129 = vmatmul.mubr.f32.gmra.mxu0 %v29
  %v130 = vpop.f32.mrf.mxu0
  %v131 = vadd.f32 %v57, %v130
  %v132 = vpop.f32.mrf.mxu0
  %133 = vmatprep.mubr.f32.mxu0 0.0
  %134 = vmatmul.mubr.f32.gmra.mxu0 %v30
  %v135 = vpop.f32.mrf.mxu0
  %v136 = vadd.f32 %v57, %v135
  %v137 = vpop.f32.mrf.mxu0
  %138 = vmatprep.mubr.f32.mxu0 0.0
  %139 = vmatmul.mubr.f32.gmra.mxu0 %v31
  %v140 = vpop.f32.mrf.mxu0
  %v141 = vadd.f32 %v57, %v140
  %v142 = vpop.f32.mrf.mxu0
  %143 = vmatprep.mubr.f32.mxu0 0.0
  %144 = vmatmul.mubr.f32.gmra.mxu0 %v32
  %v145 = vpop.f32.mrf.mxu0
  %v146 = vadd.f32 %v57, %v145
  %v147 = vpop.f32.mrf.mxu0
  %148 = vmatprep.mubr.f32.mxu0 0.0
  %149 = vmatmul.mubr.f32.gmra.mxu0 %v33
  %v150 = vpop.f32.mrf.mxu0
  %v151 = vadd.f32 %v57, %v150
  %v152 = vpop.f32.mrf.mxu0
  %153 = vmatprep.mubr.f32.mxu0 0.0
  %154 = vmatmul.mubr.f32.gmra.mxu0 %v34
  %v155 = vpop.f32.mrf.mxu0
  %v156 = vadd.f32 %v57, %v155
  %v157 = vpop.f32.mrf.mxu0
  %158 = vmatprep.mubr.f32.mxu0 0.0
  %159 = vmatmul.mubr.f32.gmra.mxu0 %v35
  %v160 = vpop.f32.mrf.mxu0
  %v161 = vadd.f32 %v57, %v160
  %v162 = vpop.f32.mrf.mxu0
  %163 = vdwg.mxu0
  %164 = vst [vmem:[#allocation2] sm:$0xff] %v126
  %165 = vst [vmem:[#allocation2 + $0x8] sm:$0xff] %v131
  %166 = vst [vmem:[#allocation2 + $0x10] sm:$0xff] %v136
  %167 = vst [vmem:[#allocation2 + $0x18] sm:$0xff] %v141
  %168 = vst [vmem:[#allocation2 + $0x20] sm:$0xff] %v146
  %169 = vst [vmem:[#allocation2 + $0x28] sm:$0xff] %v151
  %170 = vst [vmem:[#allocation2 + $0x30] sm:$0xff] %v156
  %171 = vst [vmem:[#allocation2 + $0x38] sm:$0xff] %v161
  %v172 = vld [vmem:[%s3] sm:$0xff]
  %v173 = vld [vmem:[%s3 + $0x8] sm:$0xff]
  %v174 = vld [vmem:[%s3 + $0x10] sm:$0xff]
  %v175 = vld [vmem:[%s3 + $0x18] sm:$0xff]
  %v176 = vld [vmem:[%s3 + $0x20] sm:$0xff]
  %v177 = vld [vmem:[%s3 + $0x28] sm:$0xff]
  %v178 = vld [vmem:[%s3 + $0x30] sm:$0xff]
  %v179 = vld [vmem:[%s3 + $0x38] sm:$0xff]
  %v180 = vld [vmem:[%s3 + $0x40] sm:$0xff]
  %v181 = vld [vmem:[%s3 + $0x48] sm:$0xff]
  %v182 = vld [vmem:[%s3 + $0x50] sm:$0xff]
  %v183 = vld [vmem:[%s3 + $0x58] sm:$0xff]
  %v184 = vld [vmem:[%s3 + $0x60] sm:$0xff]
  %v185 = vld [vmem:[%s3 + $0x68] sm:$0xff]
  %v186 = vld [vmem:[%s3 + $0x70] sm:$0xff]
  %v187 = vld [vmem:[%s3 + $0x78] sm:$0xff]
  %v188 = vld [vmem:[%s1] sm:$0xff]
  %v189 = vld [vmem:[#allocation2] sm:$0xff]
  %190 = vmatprep.subr.mxu0 0.0
  %191 = vmatpush1.msra.mxu0 %v187
  %192 = vmatprep.subr.mxu0 0.0
  %193 = vmatpush1.msra.mxu0 %v186
  %194 = vmatprep.subr.mxu0 0.0
  %195 = vmatpush1.msra.mxu0 %v185
  %196 = vmatprep.subr.mxu0 0.0
  %197 = vmatpush1.msra.mxu0 %v184
  %198 = vmatprep.subr.mxu0 0.0
  %199 = vmatpush1.msra.mxu0 %v183
  %200 = vmatprep.subr.mxu0 0.0
  %201 = vmatpush1.msra.mxu0 %v182
  %202 = vmatprep.subr.mxu0 0.0
  %203 = vmatpush1.msra.mxu0 %v181
  %204 = vmatprep.subr.mxu0 0.0
  %205 = vmatpush1.msra.mxu0 %v180
  %206 = vmatprep.subr.mxu0 0.0
  %207 = vmatpush1.msra.mxu0 %v179
  %208 = vmatprep.subr.mxu0 0.0
  %209 = vmatpush1.msra.mxu0 %v178
  %210 = vmatprep.subr.mxu0 0.0
  %211 = vmatpush1.msra.mxu0 %v177
  %212 = vmatprep.subr.mxu0 0.0
  %213 = vmatpush1.msra.mxu0 %v176
  %214 = vmatprep.subr.mxu0 0.0
  %215 = vmatpush1.msra.mxu0 %v175
  %216 = vmatprep.subr.mxu0 0.0
  %217 = vmatpush1.msra.mxu0 %v174
  %218 = vmatprep.subr.mxu0 0.0
  %219 = vmatpush1.msra.mxu0 %v173
  %220 = vmatprep.subr.mxu0 0.0
  %221 = vmatpush1.msra.mxu0 %v172
  %222 = vmatprep.subr.mxu0 0.0
  %223 = vmatpush2.msra.mxu0 0.0
  %224 = vmatprep.subr.mxu0 0.0
  %225 = vmatpush2.msra.mxu0 0.0
  %226 = vmatprep.subr.mxu0 0.0
  %227 = vmatpush2.msra.mxu0 0.0
  %228 = vmatprep.subr.mxu0 0.0
  %229 = vmatpush2.msra.mxu0 0.0
  %230 = vmatprep.subr.mxu0 0.0
  %231 = vmatpush2.msra.mxu0 0.0
  %232 = vmatprep.subr.mxu0 0.0
  %233 = vmatpush2.msra.mxu0 0.0
  %234 = vmatprep.subr.mxu0 0.0
  %235 = vmatpush2.msra.mxu0 0.0
  %236 = vmatprep.subr.mxu0 0.0
  %237 = vmatpush2.msra.mxu0 0.0
  %238 = vmatprep.subr.mxu0 0.0
  %239 = vmatpush2.msra.mxu0 0.0
  %240 = vmatprep.subr.mxu0 0.0
  %241 = vmatpush2.msra.mxu0 0.0
  %242 = vmatprep.subr.mxu0 0.0
  %243 = vmatpush2.msra.mxu0 0.0
  %244 = vmatprep.subr.mxu0 0.0
  %245 = vmatpush2.msra.mxu0 0.0
  %246 = vmatprep.subr.mxu0 0.0
  %247 = vmatpush2.msra.mxu0 0.0
  %248 = vmatprep.subr.mxu0 0.0
  %249 = vmatpush2.msra.mxu0 0.0
  %250 = vmatprep.subr.mxu0 0.0
  %251 = vmatpush2.msra.mxu0 0.0
  %252 = vmatprep.subr.mxu0 0.0
  %253 = vmatpush2.msra.mxu0 0.0
  %254 = vmatprep.mubr.f32.mxu0 0.0
  %255 = vmatmul.mubr.f32.gmra.mxu0 %v188
  %v256 = vpop.f32.mrf.mxu0
  %v257 = vadd.f32 0.0, %v256
  %v258 = vpop.f32.mrf.mxu0
  %259 = vdwg.mxu0
  %v260 = vadd.f32 %v189, %v257
  %v261 = vtanh.pop %v260
  %262 = vst [vmem:[#allocation2] sm:$0xff] %v261
  %s263 = scalar_lea.vmem [#allocation2], 8
  %v264 = vld [vmem:[%s263] sm:$0xff]
  %265 = vmatprep.subr.mxu0 0.0
  %266 = vmatpush1.msra.mxu0 %v187
  %267 = vmatprep.subr.mxu0 0.0
  %268 = vmatpush1.msra.mxu0 %v186
  %269 = vmatprep.subr.mxu0 0.0
  %270 = vmatpush1.msra.mxu0 %v185
  %271 = vmatprep.subr.mxu0 0.0
  %272 = vmatpush1.msra.mxu0 %v184
  %273 = vmatprep.subr.mxu0 0.0
  %274 = vmatpush1.msra.mxu0 %v183
  %275 = vmatprep.subr.mxu0 0.0
  %276 = vmatpush1.msra.mxu0 %v182
  %277 = vmatprep.subr.mxu0 0.0
  %278 = vmatpush1.msra.mxu0 %v181
  %279 = vmatprep.subr.mxu0 0.0
  %280 = vmatpush1.msra.mxu0 %v180
  %281 = vmatprep.subr.mxu0 0.0
  %282 = vmatpush1.msra.mxu0 %v179
  %283 = vmatprep.subr.mxu0 0.0
  %284 = vmatpush1.msra.mxu0 %v178
  %285 = vmatprep.subr.mxu0 0.0
  %286 = vmatpush1.msra.mxu0 %v177
  %287 = vmatprep.subr.mxu0 0.0
  %288 = vmatpush1.msra.mxu0 %v176
  %289 = vmatprep.subr.mxu0 0.0
  %290 = vmatpush1.msra.mxu0 %v175
  %291 = vmatprep.subr.mxu0 0.0
  %292 = vmatpush1.msra.mxu0 %v174
  %293 = vmatprep.subr.mxu0 0.0
  %294 = vmatpush1.msra.mxu0 %v173
  %295 = vmatprep.subr.mxu0 0.0
  %296 = vmatpush1.msra.mxu0 %v172
  %297 = vmatprep.subr.mxu0 0.0
  %298 = vmatpush2.msra.mxu0 0.0
  %299 = vmatprep.subr.mxu0 0.0
  %300 = vmatpush2.msra.mxu0 0.0
  %301 = vmatprep.subr.mxu0 0.0
  %302 = vmatpush2.msra.mxu0 0.0
  %303 = vmatprep.subr.mxu0 0.0
  %304 = vmatpush2.msra.mxu0 0.0
  %305 = vmatprep.subr.mxu0 0.0
  %306 = vmatpush2.msra.mxu0 0.0
  %307 = vmatprep.subr.mxu0 0.0
  %308 = vmatpush2.msra.mxu0 0.0
  %309 = vmatprep.subr.mxu0 0.0
  %310 = vmatpush2.msra.mxu0 0.0
  %311 = vmatprep.subr.mxu0 0.0
  %312 = vmatpush2.msra.mxu0 0.0
  %313 = vmatprep.subr.mxu0 0.0
  %314 = vmatpush2.msra.mxu0 0.0
  %315 = vmatprep.subr.mxu0 0.0
  %316 = vmatpush2.msra.mxu0 0.0
  %317 = vmatprep.subr.mxu0 0.0
  %318 = vmatpush2.msra.mxu0 0.0
  %319 = vmatprep.subr.mxu0 0.0
  %320 = vmatpush2.msra.mxu0 0.0
  %321 = vmatprep.subr.mxu0 0.0
  %322 = vmatpush2.msra.mxu0 0.0
  %323 = vmatprep.subr.mxu0 0.0
  %324 = vmatpush2.msra.mxu0 0.0
  %325 = vmatprep.subr.mxu0 0.0
  %326 = vmatpush2.msra.mxu0 0.0
  %327 = vmatprep.subr.mxu0 0.0
  %328 = vmatpush2.msra.mxu0 0.0
  %329 = vmatprep.mubr.f32.mxu0 0.0
  %330 = vmatmul.mubr.f32.gmra.mxu0 %v261
  %v331 = vpop.f32.mrf.mxu0
  %v332 = vadd.f32 0.0, %v331
  %v333 = vpop.f32.mrf.mxu0
  %334 = vdwg.mxu0
  %v335 = vadd.f32 %v264, %v332
  %v336 = vtanh.pop %v335
  %337 = vst [vmem:[%s263] sm:$0xff] %v336
  %s338 = scalar_lea.vmem [#allocation2], 16
  %v339 = vld [vmem:[%s338] sm:$0xff]
  %340 = vmatprep.subr.mxu0 0.0
  %341 = vmatpush1.msra.mxu0 %v187
  %342 = vmatprep.subr.mxu0 0.0
  %343 = vmatpush1.msra.mxu0 %v186
  %344 = vmatprep.subr.mxu0 0.0
  %345 = vmatpush1.msra.mxu0 %v185
  %346 = vmatprep.subr.mxu0 0.0
  %347 = vmatpush1.msra.mxu0 %v184
  %348 = vmatprep.subr.mxu0 0.0
  %349 = vmatpush1.msra.mxu0 %v183
  %350 = vmatprep.subr.mxu0 0.0
  %351 = vmatpush1.msra.mxu0 %v182
  %352 = vmatprep.subr.mxu0 0.0
  %353 = vmatpush1.msra.mxu0 %v181
  %354 = vmatprep.subr.mxu0 0.0
  %355 = vmatpush1.msra.mxu0 %v180
  %356 = vmatprep.subr.mxu0 0.0
  %357 = vmatpush1.msra.mxu0 %v179
  %358 = vmatprep.subr.mxu0 0.0
  %359 = vmatpush1.msra.mxu0 %v178
  %360 = vmatprep.subr.mxu0 0.0
  %361 = vmatpush1.msra.mxu0 %v177
  %362 = vmatprep.subr.mxu0 0.0
  %363 = vmatpush1.msra.mxu0 %v176
  %364 = vmatprep.subr.mxu0 0.0
  %365 = vmatpush1.msra.mxu0 %v175
  %366 = vmatprep.subr.mxu0 0.0
  %367 = vmatpush1.msra.mxu0 %v174
  %368 = vmatprep.subr.mxu0 0.0
  %369 = vmatpush1.msra.mxu0 %v173
  %370 = vmatprep.subr.mxu0 0.0
  %371 = vmatpush1.msra.mxu0 %v172
  %372 = vmatprep.subr.mxu0 0.0
  %373 = vmatpush2.msra.mxu0 0.0
  %374 = vmatprep.subr.mxu0 0.0
  %375 = vmatpush2.msra.mxu0 0.0
  %376 = vmatprep.subr.mxu0 0.0
  %377 = vmatpush2.msra.mxu0 0.0
  %378 = vmatprep.subr.mxu0 0.0
  %379 = vmatpush2.msra.mxu0 0.0
  %380 = vmatprep.subr.mxu0 0.0
  %381 = vmatpush2.msra.mxu0 0.0
  %382 = vmatprep.subr.mxu0 0.0
  %383 = vmatpush2.msra.mxu0 0.0
  %384 = vmatprep.subr.mxu0 0.0
  %385 = vmatpush2.msra.mxu0 0.0
  %386 = vmatprep.subr.mxu0 0.0
  %387 = vmatpush2.msra.mxu0 0.0
  %388 = vmatprep.subr.mxu0 0.0
  %389 = vmatpush2.msra.mxu0 0.0
  %390 = vmatprep.subr.mxu0 0.0
  %391 = vmatpush2.msra.mxu0 0.0
  %392 = vmatprep.subr.mxu0 0.0
  %393 = vmatpush2.msra.mxu0 0.0
  %394 = vmatprep.subr.mxu0 0.0
  %395 = vmatpush2.msra.mxu0 0.0
  %396 = vmatprep.subr.mxu0 0.0
  %397 = vmatpush2.msra.mxu0 0.0
  %398 = vmatprep.subr.mxu0 0.0
  %399 = vmatpush2.msra.mxu0 0.0
  %400 = vmatprep.subr.mxu0 0.0
  %401 = vmatpush2.msra.mxu0 0.0
  %402 = vmatprep.subr.mxu0 0.0
  %403 = vmatpush2.msra.mxu0 0.0
  %404 = vmatprep.mubr.f32.mxu0 0.0
  %405 = vmatmul.mubr.f32.gmra.mxu0 %v336
  %v406 = vpop.f32.mrf.mxu0
  %v407 = vadd.f32 0.0, %v406
  %v408 = vpop.f32.mrf.mxu0
  %409 = vdwg.mxu0
  %v410 = vadd.f32 %v339, %v407
  %v411 = vtanh.pop %v410
  %412 = vst [vmem:[%s338] sm:$0xff] %v411
  %s413 = scalar_lea.vmem [#allocation2], 24
  %v414 = vld [vmem:[%s413] sm:$0xff]
  %415 = vmatprep.subr.mxu0 0.0
  %416 = vmatpush1.msra.mxu0 %v187
  %417 = vmatprep.subr.mxu0 0.0
  %418 = vmatpush1.msra.mxu0 %v186
  %419 = vmatprep.subr.mxu0 0.0
  %420 = vmatpush1.msra.mxu0 %v185
  %421 = vmatprep.subr.mxu0 0.0
  %422 = vmatpush1.msra.mxu0 %v184
  %423 = vmatprep.subr.mxu0 0.0
  %424 = vmatpush1.msra.mxu0 %v183
  %425 = vmatprep.subr.mxu0 0.0
  %426 = vmatpush1.msra.mxu0 %v182
  %427 = vmatprep.subr.mxu0 0.0
  %428 = vmatpush1.msra.mxu0 %v181
  %429 = vmatprep.subr.mxu0 0.0
  %430 = vmatpush1.msra.mxu0 %v180
  %431 = vmatprep.subr.mxu0 0.0
  %432 = vmatpush1.msra.mxu0 %v179
  %433 = vmatprep.subr.mxu0 0.0
  %434 = vmatpush1.msra.mxu0 %v178
  %435 = vmatprep.subr.mxu0 0.0
  %436 = vmatpush1.msra.mxu0 %v177
  %437 = vmatprep.subr.mxu0 0.0
  %438 = vmatpush1.msra.mxu0 %v176
  %439 = vmatprep.subr.mxu0 0.0
  %440 = vmatpush1.msra.mxu0 %v175
  %441 = vmatprep.subr.mxu0 0.0
  %442 = vmatpush1.msra.mxu0 %v174
  %443 = vmatprep.subr.mxu0 0.0
  %444 = vmatpush1.msra.mxu0 %v173
  %445 = vmatprep.subr.mxu0 0.0
  %446 = vmatpush1.msra.mxu0 %v172
  %447 = vmatprep.subr.mxu0 0.0
  %448 = vmatpush2.msra.mxu0 0.0
  %449 = vmatprep.subr.mxu0 0.0
  %450 = vmatpush2.msra.mxu0 0.0
  %451 = vmatprep.subr.mxu0 0.0
  %452 = vmatpush2.msra.mxu0 0.0
  %453 = vmatprep.subr.mxu0 0.0
  %454 = vmatpush2.msra.mxu0 0.0
  %455 = vmatprep.subr.mxu0 0.0
  %456 = vmatpush2.msra.mxu0 0.0
  %457 = vmatprep.subr.mxu0 0.0
  %458 = vmatpush2.msra.mxu0 0.0
  %459 = vmatprep.subr.mxu0 0.0
  %460 = vmatpush2.msra.mxu0 0.0
  %461 = vmatprep.subr.mxu0 0.0
  %462 = vmatpush2.msra.mxu0 0.0
  %463 = vmatprep.subr.mxu0 0.0
  %464 = vmatpush2.msra.mxu0 0.0
  %465 = vmatprep.subr.mxu0 0.0
  %466 = vmatpush2.msra.mxu0 0.0
  %467 = vmatprep.subr.mxu0 0.0
  %468 = vmatpush2.msra.mxu0 0.0
  %469 = vmatprep.subr.mxu0 0.0
  %470 = vmatpush2.msra.mxu0 0.0
  %471 = vmatprep.subr.mxu0 0.0
  %472 = vmatpush2.msra.mxu0 0.0
  %473 = vmatprep.subr.mxu0 0.0
  %474 = vmatpush2.msra.mxu0 0.0
  %475 = vmatprep.subr.mxu0 0.0
  %476 = vmatpush2.msra.mxu0 0.0
  %477 = vmatprep.subr.mxu0 0.0
  %478 = vmatpush2.msra.mxu0 0.0
  %479 = vmatprep.mubr.f32.mxu0 0.0
  %480 = vmatmul.mubr.f32.gmra.mxu0 %v411
  %v481 = vpop.f32.mrf.mxu0
  %v482 = vadd.f32 0.0, %v481
  %v483 = vpop.f32.mrf.mxu0
  %484 = vdwg.mxu0
  %v485 = vadd.f32 %v414, %v482
  %v486 = vtanh.pop %v485
  %487 = vst [vmem:[%s413] sm:$0xff] %v486
  %s488 = scalar_lea.vmem [#allocation2], 32
  %v489 = vld [vmem:[%s488] sm:$0xff]
  %490 = vmatprep.subr.mxu0 0.0
  %491 = vmatpush1.msra.mxu0 %v187
  %492 = vmatprep.subr.mxu0 0.0
  %493 = vmatpush1.msra.mxu0 %v186
  %494 = vmatprep.subr.mxu0 0.0
  %495 = vmatpush1.msra.mxu0 %v185
  %496 = vmatprep.subr.mxu0 0.0
  %497 = vmatpush1.msra.mxu0 %v184
  %498 = vmatprep.subr.mxu0 0.0
  %499 = vmatpush1.msra.mxu0 %v183
  %500 = vmatprep.subr.mxu0 0.0
  %501 = vmatpush1.msra.mxu0 %v182
  %502 = vmatprep.subr.mxu0 0.0
  %503 = vmatpush1.msra.mxu0 %v181
  %504 = vmatprep.subr.mxu0 0.0
  %505 = vmatpush1.msra.mxu0 %v180
  %506 = vmatprep.subr.mxu0 0.0
  %507 = vmatpush1.msra.mxu0 %v179
  %508 = vmatprep.subr.mxu0 0.0
  %509 = vmatpush1.msra.mxu0 %v178
  %510 = vmatprep.subr.mxu0 0.0
  %511 = vmatpush1.msra.mxu0 %v177
  %512 = vmatprep.subr.mxu0 0.0
  %513 = vmatpush1.msra.mxu0 %v176
  %514 = vmatprep.subr.mxu0 0.0
  %515 = vmatpush1.msra.mxu0 %v175
  %516 = vmatprep.subr.mxu0 0.0
  %517 = vmatpush1.msra.mxu0 %v174
  %518 = vmatprep.subr.mxu0 0.0
  %519 = vmatpush1.msra.mxu0 %v173
  %520 = vmatprep.subr.mxu0 0.0
  %521 = vmatpush1.msra.mxu0 %v172
  %522 = vmatprep.subr.mxu0 0.0
  %523 = vmatpush2.msra.mxu0 0.0
  %524 = vmatprep.subr.mxu0 0.0
  %525 = vmatpush2.msra.mxu0 0.0
  %526 = vmatprep.subr.mxu0 0.0
  %527 = vmatpush2.msra.mxu0 0.0
  %528 = vmatprep.subr.mxu0 0.0
  %529 = vmatpush2.msra.mxu0 0.0
  %530 = vmatprep.subr.mxu0 0.0
  %531 = vmatpush2.msra.mxu0 0.0
  %532 = vmatprep.subr.mxu0 0.0
  %533 = vmatpush2.msra.mxu0 0.0
  %534 = vmatprep.subr.mxu0 0.0
  %535 = vmatpush2.msra.mxu0 0.0
  %536 = vmatprep.subr.mxu0 0.0
  %537 = vmatpush2.msra.mxu0 0.0
  %538 = vmatprep.subr.mxu0 0.0
  %539 = vmatpush2.msra.mxu0 0.0
  %540 = vmatprep.subr.mxu0 0.0
  %541 = vmatpush2.msra.mxu0 0.0
  %542 = vmatprep.subr.mxu0 0.0
  %543 = vmatpush2.msra.mxu0 0.0
  %544 = vmatprep.subr.mxu0 0.0
  %545 = vmatpush2.msra.mxu0 0.0
  %546 = vmatprep.subr.mxu0 0.0
  %547 = vmatpush2.msra.mxu0 0.0
  %548 = vmatprep.subr.mxu0 0.0
  %549 = vmatpush2.msra.mxu0 0.0
  %550 = vmatprep.subr.mxu0 0.0
  %551 = vmatpush2.msra.mxu0 0.0
  %552 = vmatprep.subr.mxu0 0.0
  %553 = vmatpush2.msra.mxu0 0.0
  %554 = vmatprep.mubr.f32.mxu0 0.0
  %555 = vmatmul.mubr.f32.gmra.mxu0 %v486
  %v556 = vpop.f32.mrf.mxu0
  %v557 = vadd.f32 0.0, %v556
  %v558 = vpop.f32.mrf.mxu0
  %559 = vdwg.mxu0
  %v560 = vadd.f32 %v489, %v557
  %v561 = vtanh.pop %v560
  %562 = vst [vmem:[%s488] sm:$0xff] %v561
  %s563 = scalar_lea.vmem [#allocation2], 40
  %v564 = vld [vmem:[%s563] sm:$0xff]
  %565 = vmatprep.subr.mxu0 0.0
  %566 = vmatpush1.msra.mxu0 %v187
  %567 = vmatprep.subr.mxu0 0.0
  %568 = vmatpush1.msra.mxu0 %v186
  %569 = vmatprep.subr.mxu0 0.0
  %570 = vmatpush1.msra.mxu0 %v185
  %571 = vmatprep.subr.mxu0 0.0
  %572 = vmatpush1.msra.mxu0 %v184
  %573 = vmatprep.subr.mxu0 0.0
  %574 = vmatpush1.msra.mxu0 %v183
  %575 = vmatprep.subr.mxu0 0.0
  %576 = vmatpush1.msra.mxu0 %v182
  %577 = vmatprep.subr.mxu0 0.0
  %578 = vmatpush1.msra.mxu0 %v181
  %579 = vmatprep.subr.mxu0 0.0
  %580 = vmatpush1.msra.mxu0 %v180
  %581 = vmatprep.subr.mxu0 0.0
  %582 = vmatpush1.msra.mxu0 %v179
  %583 = vmatprep.subr.mxu0 0.0
  %584 = vmatpush1.msra.mxu0 %v178
  %585 = vmatprep.subr.mxu0 0.0
  %586 = vmatpush1.msra.mxu0 %v177
  %587 = vmatprep.subr.mxu0 0.0
  %588 = vmatpush1.msra.mxu0 %v176
  %589 = vmatprep.subr.mxu0 0.0
  %590 = vmatpush1.msra.mxu0 %v175
  %591 = vmatprep.subr.mxu0 0.0
  %592 = vmatpush1.msra.mxu0 %v174
  %593 = vmatprep.subr.mxu0 0.0
  %594 = vmatpush1.msra.mxu0 %v173
  %595 = vmatprep.subr.mxu0 0.0
  %596 = vmatpush1.msra.mxu0 %v172
  %597 = vmatprep.subr.mxu0 0.0
  %598 = vmatpush2.msra.mxu0 0.0
  %599 = vmatprep.subr.mxu0 0.0
  %600 = vmatpush2.msra.mxu0 0.0
  %601 = vmatprep.subr.mxu0 0.0
  %602 = vmatpush2.msra.mxu0 0.0
  %603 = vmatprep.subr.mxu0 0.0
  %604 = vmatpush2.msra.mxu0 0.0
  %605 = vmatprep.subr.mxu0 0.0
  %606 = vmatpush2.msra.mxu0 0.0
  %607 = vmatprep.subr.mxu0 0.0
  %608 = vmatpush2.msra.mxu0 0.0
  %609 = vmatprep.subr.mxu0 0.0
  %610 = vmatpush2.msra.mxu0 0.0
  %611 = vmatprep.subr.mxu0 0.0
  %612 = vmatpush2.msra.mxu0 0.0
  %613 = vmatprep.subr.mxu0 0.0
  %614 = vmatpush2.msra.mxu0 0.0
  %615 = vmatprep.subr.mxu0 0.0
  %616 = vmatpush2.msra.mxu0 0.0
  %617 = vmatprep.subr.mxu0 0.0
  %618 = vmatpush2.msra.mxu0 0.0
  %619 = vmatprep.subr.mxu0 0.0
  %620 = vmatpush2.msra.mxu0 0.0
  %621 = vmatprep.subr.mxu0 0.0
  %622 = vmatpush2.msra.mxu0 0.0
  %623 = vmatprep.subr.mxu0 0.0
  %624 = vmatpush2.msra.mxu0 0.0
  %625 = vmatprep.subr.mxu0 0.0
  %626 = vmatpush2.msra.mxu0 0.0
  %627 = vmatprep.subr.mxu0 0.0
  %628 = vmatpush2.msra.mxu0 0.0
  %629 = vmatprep.mubr.f32.mxu0 0.0
  %630 = vmatmul.mubr.f32.gmra.mxu0 %v561
  %v631 = vpop.f32.mrf.mxu0
  %v632 = vadd.f32 0.0, %v631
  %v633 = vpop.f32.mrf.mxu0
  %634 = vdwg.mxu0
  %v635 = vadd.f32 %v564, %v632
  %v636 = vtanh.pop %v635
  %637 = vst [vmem:[%s563] sm:$0xff] %v636
  %s638 = scalar_lea.vmem [#allocation2], 48
  %v639 = vld [vmem:[%s638] sm:$0xff]
  %640 = vmatprep.subr.mxu0 0.0
  %641 = vmatpush1.msra.mxu0 %v187
  %642 = vmatprep.subr.mxu0 0.0
  %643 = vmatpush1.msra.mxu0 %v186
  %644 = vmatprep.subr.mxu0 0.0
  %645 = vmatpush1.msra.mxu0 %v185
  %646 = vmatprep.subr.mxu0 0.0
  %647 = vmatpush1.msra.mxu0 %v184
  %648 = vmatprep.subr.mxu0 0.0
  %649 = vmatpush1.msra.mxu0 %v183
  %650 = vmatprep.subr.mxu0 0.0
  %651 = vmatpush1.msra.mxu0 %v182
  %652 = vmatprep.subr.mxu0 0.0
  %653 = vmatpush1.msra.mxu0 %v181
  %654 = vmatprep.subr.mxu0 0.0
  %655 = vmatpush1.msra.mxu0 %v180
  %656 = vmatprep.subr.mxu0 0.0
  %657 = vmatpush1.msra.mxu0 %v179
  %658 = vmatprep.subr.mxu0 0.0
  %659 = vmatpush1.msra.mxu0 %v178
  %660 = vmatprep.subr.mxu0 0.0
  %661 = vmatpush1.msra.mxu0 %v177
  %662 = vmatprep.subr.mxu0 0.0
  %663 = vmatpush1.msra.mxu0 %v176
  %664 = vmatprep.subr.mxu0 0.0
  %665 = vmatpush1.msra.mxu0 %v175
  %666 = vmatprep.subr.mxu0 0.0
  %667 = vmatpush1.msra.mxu0 %v174
  %668 = vmatprep.subr.mxu0 0.0
  %669 = vmatpush1.msra.mxu0 %v173
  %670 = vmatprep.subr.mxu0 0.0
  %671 = vmatpush1.msra.mxu0 %v172
  %672 = vmatprep.subr.mxu0 0.0
  %673 = vmatpush2.msra.mxu0 0.0
  %674 = vmatprep.subr.mxu0 0.0
  %675 = vmatpush2.msra.mxu0 0.0
  %676 = vmatprep.subr.mxu0 0.0
  %677 = vmatpush2.msra.mxu0 0.0
  %678 = vmatprep.subr.mxu0 0.0
  %679 = vmatpush2.msra.mxu0 0.0
  %680 = vmatprep.subr.mxu0 0.0
  %681 = vmatpush2.msra.mxu0 0.0
  %682 = vmatprep.subr.mxu0 0.0
  %683 = vmatpush2.msra.mxu0 0.0
  %684 = vmatprep.subr.mxu0 0.0
  %685 = vmatpush2.msra.mxu0 0.0
  %686 = vmatprep.subr.mxu0 0.0
  %687 = vmatpush2.msra.mxu0 0.0
  %688 = vmatprep.subr.mxu0 0.0
  %689 = vmatpush2.msra.mxu0 0.0
  %690 = vmatprep.subr.mxu0 0.0
  %691 = vmatpush2.msra.mxu0 0.0
  %692 = vmatprep.subr.mxu0 0.0
  %693 = vmatpush2.msra.mxu0 0.0
  %694 = vmatprep.subr.mxu0 0.0
  %695 = vmatpush2.msra.mxu0 0.0
  %696 = vmatprep.subr.mxu0 0.0
  %697 = vmatpush2.msra.mxu0 0.0
  %698 = vmatprep.subr.mxu0 0.0
  %699 = vmatpush2.msra.mxu0 0.0
  %700 = vmatprep.subr.mxu0 0.0
  %701 = vmatpush2.msra.mxu0 0.0
  %702 = vmatprep.subr.mxu0 0.0
  %703 = vmatpush2.msra.mxu0 0.0
  %704 = vmatprep.mubr.f32.mxu0 0.0
  %705 = vmatmul.mubr.f32.gmra.mxu0 %v636
  %v706 = vpop.f32.mrf.mxu0
  %v707 = vadd.f32 0.0, %v706
  %v708 = vpop.f32.mrf.mxu0
  %709 = vdwg.mxu0
  %v710 = vadd.f32 %v639, %v707
  %v711 = vtanh.pop %v710
  %712 = vst [vmem:[%s638] sm:$0xff] %v711
  %s713 = scalar_lea.vmem [#allocation2], 56
  %v714 = vld [vmem:[%s713] sm:$0xff]
  %715 = vmatprep.subr.mxu0 0.0
  %716 = vmatpush1.msra.mxu0 %v187
  %717 = vmatprep.subr.mxu0 0.0
  %718 = vmatpush1.msra.mxu0 %v186
  %719 = vmatprep.subr.mxu0 0.0
  %720 = vmatpush1.msra.mxu0 %v185
  %721 = vmatprep.subr.mxu0 0.0
  %722 = vmatpush1.msra.mxu0 %v184
  %723 = vmatprep.subr.mxu0 0.0
  %724 = vmatpush1.msra.mxu0 %v183
  %725 = vmatprep.subr.mxu0 0.0
  %726 = vmatpush1.msra.mxu0 %v182
  %727 = vmatprep.subr.mxu0 0.0
  %728 = vmatpush1.msra.mxu0 %v181
  %729 = vmatprep.subr.mxu0 0.0
  %730 = vmatpush1.msra.mxu0 %v180
  %731 = vmatprep.subr.mxu0 0.0
  %732 = vmatpush1.msra.mxu0 %v179
  %733 = vmatprep.subr.mxu0 0.0
  %734 = vmatpush1.msra.mxu0 %v178
  %735 = vmatprep.subr.mxu0 0.0
  %736 = vmatpush1.msra.mxu0 %v177
  %737 = vmatprep.subr.mxu0 0.0
  %738 = vmatpush1.msra.mxu0 %v176
  %739 = vmatprep.subr.mxu0 0.0
  %740 = vmatpush1.msra.mxu0 %v175
  %741 = vmatprep.subr.mxu0 0.0
  %742 = vmatpush1.msra.mxu0 %v174
  %743 = vmatprep.subr.mxu0 0.0
  %744 = vmatpush1.msra.mxu0 %v173
  %745 = vmatprep.subr.mxu0 0.0
  %746 = vmatpush1.msra.mxu0 %v172
  %747 = vmatprep.subr.mxu0 0.0
  %748 = vmatpush2.msra.mxu0 0.0
  %749 = vmatprep.subr.mxu0 0.0
  %750 = vmatpush2.msra.mxu0 0.0
  %751 = vmatprep.subr.mxu0 0.0
  %752 = vmatpush2.msra.mxu0 0.0
  %753 = vmatprep.subr.mxu0 0.0
  %754 = vmatpush2.msra.mxu0 0.0
  %755 = vmatprep.subr.mxu0 0.0
  %756 = vmatpush2.msra.mxu0 0.0
  %757 = vmatprep.subr.mxu0 0.0
  %758 = vmatpush2.msra.mxu0 0.0
  %759 = vmatprep.subr.mxu0 0.0
  %760 = vmatpush2.msra.mxu0 0.0
  %761 = vmatprep.subr.mxu0 0.0
  %762 = vmatpush2.msra.mxu0 0.0
  %763 = vmatprep.subr.mxu0 0.0
  %764 = vmatpush2.msra.mxu0 0.0
  %765 = vmatprep.subr.mxu0 0.0
  %766 = vmatpush2.msra.mxu0 0.0
  %767 = vmatprep.subr.mxu0 0.0
  %768 = vmatpush2.msra.mxu0 0.0
  %769 = vmatprep.subr.mxu0 0.0
  %770 = vmatpush2.msra.mxu0 0.0
  %771 = vmatprep.subr.mxu0 0.0
  %772 = vmatpush2.msra.mxu0 0.0
  %773 = vmatprep.subr.mxu0 0.0
  %774 = vmatpush2.msra.mxu0 0.0
  %775 = vmatprep.subr.mxu0 0.0
  %776 = vmatpush2.msra.mxu0 0.0
  %777 = vmatprep.subr.mxu0 0.0
  %778 = vmatpush2.msra.mxu0 0.0
  %779 = vmatprep.mubr.f32.mxu0 0.0
  %780 = vmatmul.mubr.f32.gmra.mxu0 %v711
  %v781 = vpop.f32.mrf.mxu0
  %v782 = vadd.f32 0.0, %v781
  %v783 = vpop.f32.mrf.mxu0
  %784 = vdwg.mxu0
  %v785 = vadd.f32 %v714, %v782
  %v786 = vtanh.pop %v785
  %787 = vst [vmem:[%s713] sm:$0xff] %v786
  %788 = vst [vmem:[%s8] sm:$0xff] %v786
  %v789 = vld [vmem:[#allocation2] sm:$0xff]
  %v790 = vld [vmem:[#allocation2 + $0x8] sm:$0xff]
  %v791 = vld [vmem:[#allocation2 + $0x10] sm:$0xff]
  %v792 = vld [vmem:[#allocation2 + $0x18] sm:$0xff]
  %v793 = vld [vmem:[#allocation2 + $0x20] sm:$0xff]
  %v794 = vld [vmem:[#allocation2 + $0x28] sm:$0xff]
  %v795 = vld [vmem:[#allocation2 + $0x30] sm:$0xff]
  %v796 = vld [vmem:[#allocation2 + $0x38] sm:$0xff]
  %v797 = vld [vmem:[%s5] sm:$0xff]
  %v798 = vld [vmem:[%s5 + $0x8] sm:$0xff]
  %v799 = vld [vmem:[%s5 + $0x10] sm:$0xff]
  %v800 = vld [vmem:[%s5 + $0x18] sm:$0xff]
  %v801 = vld [vmem:[%s5 + $0x20] sm:$0xff]
  %v802 = vld [vmem:[%s5 + $0x28] sm:$0xff]
  %v803 = vld [vmem:[%s5 + $0x30] sm:$0xff]
  %v804 = vld [vmem:[%s5 + $0x38] sm:$0xff]
  %v805 = vld [vmem:[%s5 + $0x40] sm:$0xff]
  %v806 = vld [vmem:[%s5 + $0x48] sm:$0xff]
  %v807 = vld [vmem:[%s5 + $0x50] sm:$0xff]
  %v808 = vld [vmem:[%s5 + $0x58] sm:$0xff]
  %v809 = vld [vmem:[%s5 + $0x60] sm:$0xff]
  %v810 = vld [vmem:[%s5 + $0x68] sm:$0xff]
  %v811 = vld [vmem:[%s5 + $0x70] sm:$0xff]
  %v812 = vld [vmem:[%s5 + $0x78] sm:$0xff]
  %v813 = vld [vmem:[%s6] sm:$0x1]
  %v815 = vlaneseq
  %v816 = vshrl.u32 %v815, 7
  %v817 = vsub.s32 0, %v816
  %v818 = vrot.slane %v813, %v817
  %820 = vmatprep.subr.mxu0 0.0
  %821 = vmatpush1.msra.mxu0 %v812
  %822 = vmatprep.subr.mxu0 0.0
  %823 = vmatpush1.msra.mxu0 %v811
  %824 = vmatprep.subr.mxu0 0.0
  %825 = vmatpush1.msra.mxu0 %v810
  %826 = vmatprep.subr.mxu0 0.0
  %827 = vmatpush1.msra.mxu0 %v809
  %828 = vmatprep.subr.mxu0 0.0
  %829 = vmatpush1.msra.mxu0 %v808
  %830 = vmatprep.subr.mxu0 0.0
  %831 = vmatpush1.msra.mxu0 %v807
  %832 = vmatprep.subr.mxu0 0.0
  %833 = vmatpush1.msra.mxu0 %v806
  %834 = vmatprep.subr.mxu0 0.0
  %835 = vmatpush1.msra.mxu0 %v805
  %836 = vmatprep.subr.mxu0 0.0
  %837 = vmatpush1.msra.mxu0 %v804
  %838 = vmatprep.subr.mxu0 0.0
  %839 = vmatpush1.msra.mxu0 %v803
  %840 = vmatprep.subr.mxu0 0.0
  %841 = vmatpush1.msra.mxu0 %v802
  %842 = vmatprep.subr.mxu0 0.0
  %843 = vmatpush1.msra.mxu0 %v801
  %844 = vmatprep.subr.mxu0 0.0
  %845 = vmatpush1.msra.mxu0 %v800
  %846 = vmatprep.subr.mxu0 0.0
  %847 = vmatpush1.msra.mxu0 %v799
  %848 = vmatprep.subr.mxu0 0.0
  %849 = vmatpush1.msra.mxu0 %v798
  %850 = vmatprep.subr.mxu0 0.0
  %851 = vmatpush1.msra.mxu0 %v797
  %852 = vmatprep.subr.mxu0 0.0
  %853 = vmatpush2.msra.mxu0 0.0
  %854 = vmatprep.subr.mxu0 0.0
  %855 = vmatpush2.msra.mxu0 0.0
  %856 = vmatprep.subr.mxu0 0.0
  %857 = vmatpush2.msra.mxu0 0.0
  %858 = vmatprep.subr.mxu0 0.0
  %859 = vmatpush2.msra.mxu0 0.0
  %860 = vmatprep.subr.mxu0 0.0
  %861 = vmatpush2.msra.mxu0 0.0
  %862 = vmatprep.subr.mxu0 0.0
  %863 = vmatpush2.msra.mxu0 0.0
  %864 = vmatprep.subr.mxu0 0.0
  %865 = vmatpush2.msra.mxu0 0.0
  %866 = vmatprep.subr.mxu0 0.0
  %867 = vmatpush2.msra.mxu0 0.0
  %868 = vmatprep.subr.mxu0 0.0
  %869 = vmatpush2.msra.mxu0 0.0
  %870 = vmatprep.subr.mxu0 0.0
  %871 = vmatpush2.msra.mxu0 0.0
  %872 = vmatprep.subr.mxu0 0.0
  %873 = vmatpush2.msra.mxu0 0.0
  %874 = vmatprep.subr.mxu0 0.0
  %875 = vmatpush2.msra.mxu0 0.0
  %876 = vmatprep.subr.mxu0 0.0
  %877 = vmatpush2.msra.mxu0 0.0
  %878 = vmatprep.subr.mxu0 0.0
  %879 = vmatpush2.msra.mxu0 0.0
  %880 = vmatprep.subr.mxu0 0.0
  %881 = vmatpush2.msra.mxu0 0.0
  %882 = vmatprep.subr.mxu0 0.0
  %883 = vmatpush2.msra.mxu0 0.0
  %884 = vmatprep.mubr.f32.mxu0 0.0
  %885 = vmatmul.mubr.f32.gmra.mxu0 %v789
  %v886 = vpop.f32.mrf.mxu0
  %v887 = vadd.f32 %v818, %v886
  %v888 = vpop.f32.mrf.mxu0
  %889 = vmatprep.mubr.f32.mxu0 0.0
  %890 = vmatmul.mubr.f32.gmra.mxu0 %v790
  %v891 = vpop.f32.mrf.mxu0
  %v892 = vadd.f32 %v818, %v891
  %v893 = vpop.f32.mrf.mxu0
  %894 = vmatprep.mubr.f32.mxu0 0.0
  %895 = vmatmul.mubr.f32.gmra.mxu0 %v791
  %v896 = vpop.f32.mrf.mxu0
  %v897 = vadd.f32 %v818, %v896
  %v898 = vpop.f32.mrf.mxu0
  %899 = vmatprep.mubr.f32.mxu0 0.0
  %900 = vmatmul.mubr.f32.gmra.mxu0 %v792
  %v901 = vpop.f32.mrf.mxu0
  %v902 = vadd.f32 %v818, %v901
  %v903 = vpop.f32.mrf.mxu0
  %904 = vmatprep.mubr.f32.mxu0 0.0
  %905 = vmatmul.mubr.f32.gmra.mxu0 %v793
  %v906 = vpop.f32.mrf.mxu0
  %v907 = vadd.f32 %v818, %v906
  %v908 = vpop.f32.mrf.mxu0
  %909 = vmatprep.mubr.f32.mxu0 0.0
  %910 = vmatmul.mubr.f32.gmra.mxu0 %v794
  %v911 = vpop.f32.mrf.mxu0
  %v912 = vadd.f32 %v818, %v911
  %v913 = vpop.f32.mrf.mxu0
  %914 = vmatprep.mubr.f32.mxu0 0.0
  %915 = vmatmul.mubr.f32.gmra.mxu0 %v795
  %v916 = vpop.f32.mrf.mxu0
  %v917 = vadd.f32 %v818, %v916
  %v918 = vpop.f32.mrf.mxu0
  %919 = vmatprep.mubr.f32.mxu0 0.0
  %920 = vmatmul.mubr.f32.gmra.mxu0 %v796
  %v921 = vpop.f32.mrf.mxu0
  %v922 = vadd.f32 %v818, %v921
  %v923 = vpop.f32.mrf.mxu0
  %924 = vdwg.mxu0
  %925 = vst [vmem:[%s7] sm:$0xff] %v887
  %926 = vst [vmem:[%s7 + $0x8] sm:$0xff] %v892
  %927 = vst [vmem:[%s7 + $0x10] sm:$0xff] %v897
  %928 = vst [vmem:[%s7 + $0x18] sm:$0xff] %v902
  %929 = vst [vmem:[%s7 + $0x20] sm:$0xff] %v907
  %930 = vst [vmem:[%s7 + $0x28] sm:$0xff] %v912
  %931 = vst [vmem:[%s7 + $0x30] sm:$0xff] %v917
  %932 = vst [vmem:[%s7 + $0x38] sm:$0xff] %v922
  // Predicated region
  $region30: #{simple_rnn_forward.1} parent=0 // pred_check
    _
  $region31: #{simple_rnn_forward.1} parent=0 // pred_check_branch
    %934 = sbr.rel (0) target = $region33
  $region32: #{simple_rnn_forward.1} parent=0 // pred_region
    _
  $region33: #{simple_rnn_forward.1} parent=0 // pred_fallthru
    _
  // Predicated region
  $region34: #{simple_rnn_forward.1} parent=0 // pred_check
    _
  $region35: #{simple_rnn_forward.1} parent=0 // pred_check_branch
    %936 = sbr.rel (0) target = $region37
  $region36: #{simple_rnn_forward.1} parent=0 // pred_region
    _
  $region37: #{simple_rnn_forward.1} parent=0 // pred_fallthru
    _
  // Predicated region
  $region38: #{simple_rnn_forward.1} parent=0 // pred_check
    _
  $region39: #{simple_rnn_forward.1} parent=0 // pred_check_branch
    %938 = sbr.rel (0) target = $region41
  $region40: #{simple_rnn_forward.1} parent=0 // pred_region
    _
  $region41: #{simple_rnn_forward.1} parent=0 // pred_fallthru
    _
  // Predicated region
  $region42: #{simple_rnn_forward.1} parent=0 // pred_check
    _
  $region43: #{simple_rnn_forward.1} parent=0 // pred_check_branch
    %940 = sbr.rel (0) target = $region45
  $region44: #{simple_rnn_forward.1} parent=0 // pred_region
    _
  $region45: #{simple_rnn_forward.1} parent=0 // pred_fallthru
    _

</llo_original>
